<compile_context>
chip_gen: v6e
topology: v6e:2x2x1
jax: 0.10.0
libtpu: 0.0.40
codegen_flags: <defaults>
</compile_context>

<pallas_src>
import functools
import math

import jax
import jax.numpy as jnp
from jax import lax
from jax.experimental import pallas as pl
from jax.experimental.pallas import tpu as pltpu


def head_kernel(x_ref, wqkv_ref, o_ref, *, head_size, scale):
    # x_ref: (1, T, C), wqkv_ref: (C, 3H) [q | k | v], o_ref: (1, T, H)
    x = x_ref[0]                 # (T, C), input dtype (bf16/f32) fed straight to the MXU
    w = wqkv_ref[...]            # (C, 3H)

    # Single fused projection; accumulate in f32 on the MXU.
    qkv = jnp.dot(x, w, preferred_element_type=jnp.float32)   # (T, 3H) f32
    H = head_size
    q = qkv[:, 0 * H:1 * H]      # (T, H)
    k = qkv[:, 1 * H:2 * H]
    v = qkv[:, 2 * H:3 * H]

    # q @ k^T without materializing k.T: contract last dim of both.
    s = lax.dot_general(q, k, dimension_numbers=(((1,), (1,)), ((), ())),
                        preferred_element_type=jnp.float32) * scale   # (T, T)

    # Causal mask (large finite negative: NaN-safe even for fully-masked rows).
    T = s.shape[0]
    row = lax.broadcasted_iota(jnp.int32, (T, T), 0)
    col = lax.broadcasted_iota(jnp.int32, (T, T), 1)
    s = jnp.where(col <= row, s, -1e30)

    # Numerically-stable softmax in f32; denominator reciprocal on the EUP.
    m = jnp.max(s, axis=-1, keepdims=True)
    p = jnp.exp(s - m)
    denom = jnp.sum(p, axis=-1, keepdims=True)
    p = p * pl.reciprocal(denom, approx=True)

    # attn @ v: feed the MXU in the input dtype, accumulate f32.
    out = jnp.dot(p.astype(x.dtype), v.astype(x.dtype),
                  preferred_element_type=jnp.float32)          # (T, H)
    o_ref[0] = out.astype(o_ref.dtype)


def head_forward(x, w_key, w_query, w_value):
    """x: (B, T, C); w_*: torch-style (head_size, n_embed). Returns (B, T, head_size)."""
    B, T, C = x.shape
    H = w_key.shape[0]

    # Fuse the three projections into one (C, 3H) matrix: [Wq^T | Wk^T | Wv^T].
    w_qkv = jnp.concatenate([w_query.T, w_key.T, w_value.T], axis=1).astype(x.dtype)

    kernel = functools.partial(
        head_kernel, head_size=H, scale=1.0 / math.sqrt(C))  # PyTorch module scales by 1/sqrt(n_embed)

    return pl.pallas_call(
        kernel,
        out_shape=jax.ShapeDtypeStruct((B, T, H), x.dtype),
        grid_spec=pltpu.PrefetchScalarGridSpec(
            num_scalar_prefetch=0,
            grid=(B,),
            in_specs=[
                pl.BlockSpec((1, T, C), lambda b: (b, 0, 0)),
                pl.BlockSpec((C, 3 * H), lambda b: (0, 0)),   # weights resident across grid steps
            ],
            out_specs=pl.BlockSpec((1, T, H), lambda b: (b, 0, 0)),
        ),
        compiler_params=pltpu.CompilerParams(
            # Batch axis is independent: shards across the 2 TensorCores on v7x,
            # harmless serial loop on single-TC v5e/v6e.
            dimension_semantics=("parallel",),
        ),
    )(x, w_qkv)


def head_reference(x, w_key, w_query, w_value):
    """Pure-JAX reference matching the PyTorch module exactly."""
    B, T, C = x.shape
    k = x @ w_key.T
    q = x @ w_query.T
    v = x @ w_value.T
    scale = 1.0 / math.sqrt(C)
    s = jnp.einsum("btd,bsd->bts", q, k) * scale
    mask = jnp.tril(jnp.ones((T, T), dtype=bool))
    s = jnp.where(mask[None, :, :], s, -jnp.inf)
    p = jax.nn.softmax(s, axis=-1)
    return jnp.einsum("bts,bsd->btd", p, v)


if __name__ == "__main__":
    # Module config (small, consistent with the forward pass).
    batch = 2
    context_length = 8   # T
    n_embed = 32         # C
    head_size = 16       # H

    key = jax.random.PRNGKey(0)
    kx, kk, kq, kv = jax.random.split(key, 4)

    x = jax.random.normal(kx, (batch, context_length, n_embed), dtype=jnp.float32)

    # Deterministic init matching nn.Linear(bias=False): U(-1/sqrt(fan_in), 1/sqrt(fan_in)),
    # weight shape (out_features, in_features) = (head_size, n_embed).
    bound = 1.0 / math.sqrt(n_embed)
    w_key_p = jax.random.uniform(kk, (head_size, n_embed), jnp.float32, -bound, bound)
    w_query_p = jax.random.uniform(kq, (head_size, n_embed), jnp.float32, -bound, bound)
    w_value_p = jax.random.uniform(kv, (head_size, n_embed), jnp.float32, -bound, bound)

    out = head_forward(x, w_key_p, w_query_p, w_value_p)
    out = jax.block_until_ready(out)

    ref = head_reference(x, w_key_p, w_query_p, w_value_p)
    assert out.shape == (batch, context_length, head_size)
    # Tolerance accounts for the approximate (EUP) reciprocal in the softmax denominator.
    assert jnp.allclose(out, ref, atol=2e-3, rtol=2e-3), "mismatch vs reference"

    print("KERNEL_OK")
</pallas_src>

<mosaic_0001>
module attributes {stable_mosaic.version = 11 : i64} {
  func.func @head_kernel(%arg0: i32, %arg1: memref<1x8x32xf32, #tpu.memory_space<vmem>>, %arg2: memref<32x48xf32, #tpu.memory_space<vmem>>, %arg3: memref<1x8x16xf32, #tpu.memory_space<vmem>>) attributes {dimension_semantics = [#tpu.dimension_semantics<parallel>], iteration_bounds = array<i64: 2>, scalar_prefetch = 0 : i64, scratch_operands = 0 : i64, tpu.core_type = #tpu.core_type<tc>, window_params = [{transform_indices = @transform_0, window_bounds = array<i64: 1, 8, 32>}, {pipeline_mode = #tpu.pipeline_mode<synchronous>, transform_indices = @transform_1, window_bounds = array<i64: 32, 48>}, {transform_indices = @transform_2, window_bounds = array<i64: 1, 8, 16>}]} {
    %c0 = arith.constant 0 : index
    %c0_0 = arith.constant 0 : index
    %c0_1 = arith.constant 0 : index
    %0 = vector.load %arg1[%c0, %c0_0, %c0_1] : memref<1x8x32xf32, #tpu.memory_space<vmem>>, vector<1x8x32xf32>
    %1 = vector.shape_cast %0 : vector<1x8x32xf32> to vector<8x32xf32>
    %c0_2 = arith.constant 0 : index
    %c0_3 = arith.constant 0 : index
    %2 = vector.load %arg2[%c0_2, %c0_3] : memref<32x48xf32, #tpu.memory_space<vmem>>, vector<32x48xf32>
    %cst = arith.constant dense<0.000000e+00> : vector<8x48xf32>
    %3 = tpu.matmul %1, %2, %cst {dimension_numbers = #tpu.dot_dimension_numbers<[1], [0], [0], [1], [0, 0, 1, 1], [], []>} : vector<8x32xf32>, vector<32x48xf32>, vector<8x48xf32> -> vector<8x48xf32>
    %4 = vector.extract_strided_slice %3 {offsets = [0, 0], sizes = [8, 16], strides = [1, 1]} : vector<8x48xf32> to vector<8x16xf32>
    %5 = vector.extract_strided_slice %3 {offsets = [0, 16], sizes = [8, 16], strides = [1, 1]} : vector<8x48xf32> to vector<8x16xf32>
    %6 = vector.extract_strided_slice %3 {offsets = [0, 32], sizes = [8, 16], strides = [1, 1]} : vector<8x48xf32> to vector<8x16xf32>
    %cst_4 = arith.constant dense<0.000000e+00> : vector<8x8xf32>
    %7 = tpu.matmul %4, %5, %cst_4 {dimension_numbers = #tpu.dot_dimension_numbers<[1], [1], [0], [0], [0, 0, 1, 0], [], []>} : vector<8x16xf32>, vector<8x16xf32>, vector<8x8xf32> -> vector<8x8xf32>
    %cst_5 = arith.constant 0.176776692 : f32
    %8 = vector.broadcast %cst_5 : f32 to vector<8x8xf32>
    %9 = arith.mulf %7, %8 : vector<8x8xf32>
    %10 = tpu.iota {dimensions = array<i32: 0>} : vector<8x8xi32>
    %11 = tpu.iota {dimensions = array<i32: 1>} : vector<8x8xi32>
    %12 = arith.cmpi sle, %11, %10 : vector<8x8xi32>
    %cst_6 = arith.constant -1.000000e+30 : f32
    %13 = vector.broadcast %cst_6 : f32 to vector<8x8xf32>
    %14 = arith.select %12, %9, %13 : vector<8x8xi1>, vector<8x8xf32>
    %cst_7 = arith.constant dense<0xFF800000> : vector<8xf32>
    %15 = vector.multi_reduction <maximumf>, %14, %cst_7 [1] : vector<8x8xf32> to vector<8xf32>
    %16 = vector.shape_cast %15 : vector<8xf32> to vector<8x1xf32>
    %17 = vector.broadcast %16 : vector<8x1xf32> to vector<8x8xf32>
    %18 = arith.subf %14, %17 : vector<8x8xf32>
    %19 = math.exp %18 : vector<8x8xf32>
    %cst_8 = arith.constant dense<0.000000e+00> : vector<8xf32>
    %20 = vector.multi_reduction <add>, %19, %cst_8 [1] : vector<8x8xf32> to vector<8xf32>
    %21 = vector.shape_cast %20 : vector<8xf32> to vector<8x1xf32>
    %22 = tpu.reciprocal %21 {approx = true} : vector<8x1xf32> -> vector<8x1xf32>
    %23 = vector.broadcast %22 : vector<8x1xf32> to vector<8x8xf32>
    %24 = arith.mulf %19, %23 : vector<8x8xf32>
    %cst_9 = arith.constant dense<0.000000e+00> : vector<8x16xf32>
    %25 = tpu.matmul %24, %6, %cst_9 {dimension_numbers = #tpu.dot_dimension_numbers<[1], [0], [0], [1], [0, 0, 1, 1], [], []>} : vector<8x8xf32>, vector<8x16xf32>, vector<8x16xf32> -> vector<8x16xf32>
    %c0_10 = arith.constant 0 : index
    %c0_11 = arith.constant 0 : index
    %c0_12 = arith.constant 0 : index
    %26 = vector.load %arg3[%c0_10, %c0_11, %c0_12] : memref<1x8x16xf32, #tpu.memory_space<vmem>>, vector<1x8x16xf32>
    %27 = vector.shape_cast %26 : vector<1x8x16xf32> to vector<8x16xf32>
    %28 = vector.shape_cast %25 : vector<8x16xf32> to vector<1x8x16xf32>
    tpu.vector_store %arg3[%c0_10, %c0_11, %c0_12], %28 {strides = array<i32>} : memref<1x8x16xf32, #tpu.memory_space<vmem>>, vector<1x8x16xf32>,
    return
  }
  func.func @transform_0(%arg0: i32) -> (i32, i32, i32) {
    %c0_i32 = arith.constant 0 : i32
    %c0_i32_0 = arith.constant 0 : i32
    %c0_i32_1 = arith.constant 0 : i32
    return %arg0, %c0_i32, %c0_i32_0 : i32, i32, i32
  }
  func.func @transform_1(%arg0: i32) -> (i32, i32) {
    %c0_i32 = arith.constant 0 : i32
    %c0_i32_0 = arith.constant 0 : i32
    %c0_i32_1 = arith.constant 0 : i32
    return %c0_i32, %c0_i32_0 : i32, i32
  }
  func.func @transform_2(%arg0: i32) -> (i32, i32, i32) {
    %c0_i32 = arith.constant 0 : i32
    %c0_i32_0 = arith.constant 0 : i32
    %c0_i32_1 = arith.constant 0 : i32
    return %arg0, %c0_i32, %c0_i32_0 : i32, i32, i32
  }
}

</mosaic_0001>

<llo_original>
// kernel: tpu_custom_call.1
$region0: #{tpu_custom_call.1}
  #allocation0 [shape = 'u32[]', space=smem, size = 0x4, offset = 0x4, fixed_abs, tag = 'smem constant byte address 0x4 - core index']
  #allocation1 [shape = 'u32[144,128]{1,0:T(1,128)}', space=vmem, size = 0x12000, scoped, tag = 'internal scratch']
  %s0 = inlined_call_operand.hbm [shape: f32[2,8,32], index: 0, kind: input, shape index: {}]
  %s1 = inlined_call_operand.hbm [shape: f32[32,48], index: 1, kind: input, shape index: {}]
  %s2 = inlined_call_operand.hbm [shape: f32[2,8,16], index: 2, kind: output, shape index: {}]
  %s3 = sld [smem:[#allocation0]]
  $region49: #{tpu_custom_call.1} parent=0
    _
  %s5 = ssub.s32 1, %s3
  %s6 = scalar_select 0, %s5, %s3
  $region1: #{tpu_custom_call.1} parent=0
    #allocation2 [shape = 'u8[8192]{0}', space=vmem, size = 0x2000, scoped, tag = 'input window, operand 0']
    #allocation3 [shape = 's32[2]{0}', space=sflag, size = 0x8, scoped, tag = 'scoped memory for tpu_custom_call.1']
    #allocation4 [shape = 's32[2]{0}', space=sflag, size = 0x8, scoped, tag = 'scoped memory for tpu_custom_call.1']
    #allocation5 [shape = 'u8[16384]{0}', space=vmem, size = 0x4000, scoped, tag = 'input window, operand 1, single buffered']
    #allocation6 [shape = 's32[1]{0}', space=sflag, size = 0x4, scoped, tag = 'scoped memory for tpu_custom_call.1']
    #allocation7 [shape = 'u8[8192]{0}', space=vmem, size = 0x2000, scoped, tag = 'output window, operand 0']
    %7 = vsyncpa [#allocation3], 0
    %s8 = scalar_lea.sflag [#allocation3], 1
    %9 = vsyncpa %s8, 0
    %10 = vsyncpa [#allocation6], 0
    %11 = vsyncpa [#allocation4], 0
    %s12 = scalar_lea.sflag [#allocation4], 1
    %13 = vsyncpa %s12, 0
    loop: start=0, step=1, limit=4
    $region2: #{tpu_custom_call.1} parent=1 // loop_pre_header
      _
    $region3: #{tpu_custom_call.1} parent=1 // loop_header
      %s15 = sphi 0, %s19
      %p16 = scmp.ge.s32.totalorder %s15, 4
      %s25 = sphi 0, %s27
      %s28 = sphi 0, %s25
      %s29 = sphi 0, %s28
      %s45 = sphi 0, %s29
      %s49 = sphi 0, %s49
      %s51 = sphi 0, %s49
      %s52 = sphi 0, %s51
      %s66 = sphi 0, %s52
      %s72 = sphi 0, %s74
      %s75 = sphi 0, %s72
      %s76 = sphi 0, %s75
      %s92 = sphi 0, %s76
    $region4: #{tpu_custom_call.1} parent=1 // loop_header_branch
      %18 = sbr.rel (%p16) target = $region8
    $region5: #{tpu_custom_call.1} parent=1 // loop_body
      %s20 = ssub.s32 %s15, 1
      %s21 = ssub.s32 %s15, 2
      %s22 = sadd.s32 %s15, 1
      %s23 = ssub.s32 %s15, %s22
      %p24 = scmp.eq.s32.totalorder %s23, 0
      %s26 = sadd.s32 %s25, 1
      %s27 = scalar_select %p24, %s25, %s26
      %p30 = pneg %p24
      %p31 = scmp.eq.s32.totalorder %s15, 1
      %p32 = por %p30, %p31
      %p33 = scmp.ne.s32.totalorder %s25, %s28
      %p34 = scmp.eq.s32.totalorder %s15, 0
      %p35 = por %p33, %p34
      %p36 = scmp.ne.s32.totalorder %s25, %s28
      %p37 = scmp.eq.s32.totalorder %s20, 1
      %p38 = por %p36, %p37
      %p39 = scmp.ne.s32.totalorder %s28, %s29
      %p40 = scmp.eq.s32.totalorder %s20, 0
      %p41 = por %p39, %p40
      %p42 = scmp.ne.s32.totalorder %s28, %s29
      %p43 = scmp.eq.s32.totalorder %s21, 1
      %p44 = por %p42, %p43
      %p46 = scmp.ne.s32.totalorder %s29, %s45
      %p47 = scmp.eq.s32.totalorder %s21, 0
      %p48 = por %p46, %p47
      %s50 = sadd.s32 %s49, 1
      %p53 = scmp.eq.s32.totalorder %s15, 1
      %p54 = scmp.ne.s32.totalorder %s49, %s51
      %p55 = scmp.eq.s32.totalorder %s15, 0
      %p56 = por %p54, %p55
      %p57 = scmp.ne.s32.totalorder %s49, %s51
      %p58 = scmp.eq.s32.totalorder %s20, 1
      %p59 = por %p57, %p58
      %p60 = scmp.ne.s32.totalorder %s51, %s52
      %p61 = scmp.eq.s32.totalorder %s20, 0
      %p62 = por %p60, %p61
      %p63 = scmp.ne.s32.totalorder %s51, %s52
      %p64 = scmp.eq.s32.totalorder %s21, 1
      %p65 = por %p63, %p64
      %p67 = scmp.ne.s32.totalorder %s52, %s66
      %p68 = scmp.eq.s32.totalorder %s21, 0
      %p69 = por %p67, %p68
      %s70 = ssub.s32 %s15, %s22
      %p71 = scmp.eq.s32.totalorder %s70, 0
      %s73 = sadd.s32 %s72, 1
      %s74 = scalar_select %p71, %s72, %s73
      %p77 = pneg %p71
      %p78 = scmp.eq.s32.totalorder %s15, 1
      %p79 = por %p77, %p78
      %p80 = scmp.ne.s32.totalorder %s72, %s75
      %p81 = scmp.eq.s32.totalorder %s15, 0
      %p82 = por %p80, %p81
      %p83 = scmp.ne.s32.totalorder %s72, %s75
      %p84 = scmp.eq.s32.totalorder %s20, 1
      %p85 = por %p83, %p84
      %p86 = scmp.ne.s32.totalorder %s75, %s76
      %p87 = scmp.eq.s32.totalorder %s20, 0
      %p88 = por %p86, %p87
      %p89 = scmp.ne.s32.totalorder %s75, %s76
      %p90 = scmp.eq.s32.totalorder %s21, 1
      %p91 = por %p89, %p90
      %p93 = scmp.ne.s32.totalorder %s76, %s92
      %p94 = scmp.eq.s32.totalorder %s21, 0
      %p95 = por %p93, %p94
      %p96 = scmp.le.s32.totalorder 1, %s15
      %p97 = scmp.lt.s32.totalorder %s15, 3
      %p98 = pnand %p96, %p97
      %p99 = pneg %p98
      // Predicated region
      $region9: #{tpu_custom_call.1} parent=5 // pred_check
        _
      $region10: #{tpu_custom_call.1} parent=5 // pred_check_branch
        %101 = sbr.rel (%p98) target = $region12
      $region11: #{tpu_custom_call.1} parent=5 // pred_region
        %s102 = ssub.s32 %s15, 1
        // Predicated region
        $region13: #{tpu_custom_call.1} parent=11 // pred_check
          %p103 = pneg %p62
        $region14: #{tpu_custom_call.1} parent=11 // pred_check_branch
          %105 = sbr.rel (%p103) target = $region16
        $region15: #{tpu_custom_call.1} parent=11 // pred_region
          %s107 = ssub.s32 512, 512
          %108 = vsyncadd [#allocation6], %s107
          %s109 = sshll.u32 [#allocation5], 4
          %s110 = int_to_ptr.vmem [resolvable:$true] %s109
          %115 = dma.hbm_to_vmem [thread:$0]  %s1, 512, %s110, [#allocation6], 128, 128, 8
        $region16: #{tpu_custom_call.1} parent=11 // pred_fallthru
          _
      $region12: #{tpu_custom_call.1} parent=5 // pred_fallthru
        _
      %p116 = scmp.lt.s32.totalorder %s15, 2
      // Predicated region
      $region17: #{tpu_custom_call.1} parent=5 // pred_check
        %p117 = pneg %p116
      $region18: #{tpu_custom_call.1} parent=5 // pred_check_branch
        %119 = sbr.rel (%p117) target = $region20
      $region19: #{tpu_custom_call.1} parent=5 // pred_region
        // Predicated region
        $region21: #{tpu_custom_call.1} parent=19 // pred_check
          %p120 = pneg %p35
        $region22: #{tpu_custom_call.1} parent=19 // pred_check_branch
          %122 = sbr.rel (%p120) target = $region24
        $region23: #{tpu_custom_call.1} parent=19 // pred_region
          %s123 = sand.u32 %s25, 1
          %s124 = scalar_lea.sflag [#allocation3], %s123
          %s125 = sand.u32 %s25, 1
          %s126 = smul.addr %s125, 8
          %s127 = scalar_lea.vmem [#allocation2], %s126
          %s129 = ssub.s32 128, 128
          %130 = vsyncadd %s124, %s129
          %s131 = smul.addr %s15, 128
          %s132 = scalar_lea.hbm %s0, %s131
          %s134 = sshll.u32 %s127, 4
          %s135 = int_to_ptr.vmem [resolvable:$true] %s134
          %137 = dma.hbm_to_vmem [thread:$0]  %s132, 128, %s135, %s124
        $region24: #{tpu_custom_call.1} parent=19 // pred_fallthru
          _
      $region20: #{tpu_custom_call.1} parent=5 // pred_fallthru
        _
      %p138 = scmp.le.s32.totalorder 1, %s15
      %p139 = scmp.lt.s32.totalorder %s15, 3
      %p140 = pnand %p138, %p139
      %p141 = pneg %p140
      // Predicated region
      $region25: #{tpu_custom_call.1} parent=5 // pred_check
        _
      $region26: #{tpu_custom_call.1} parent=5 // pred_check_branch
        %143 = sbr.rel (%p140) target = $region28
      $region27: #{tpu_custom_call.1} parent=5 // pred_region
        %s144 = ssub.s32 %s15, 1
        %s145 = sand.u32 %s28, 1
        %s146 = scalar_lea.sflag [#allocation3], %s145
        %s147 = sand.u32 %s28, 1
        %s148 = smul.addr %s147, 8
        %s149 = scalar_lea.vmem [#allocation2], %s148
        // Predicated region
        $region29: #{tpu_custom_call.1} parent=27 // pred_check
          %p150 = pneg %p41
        $region30: #{tpu_custom_call.1} parent=27 // pred_check_branch
          %152 = sbr.rel (%p150) target = $region32
        $region31: #{tpu_custom_call.1} parent=27 // pred_region
          %153 = dma.done %s146, 128
        $region32: #{tpu_custom_call.1} parent=27 // pred_fallthru
          _
        // Predicated region
        $region33: #{tpu_custom_call.1} parent=27 // pred_check
          %p154 = pneg %p62
        $region34: #{tpu_custom_call.1} parent=27 // pred_check_branch
          %156 = sbr.rel (%p154) target = $region36
        $region35: #{tpu_custom_call.1} parent=27 // pred_region
          %157 = dma.done [#allocation6], 512
        $region36: #{tpu_custom_call.1} parent=27 // pred_fallthru
          _
        %s158 = sand.u32 %s28, 1
        %s159 = scalar_lea.sflag [#allocation3], %s158
        %s160 = sand.u32 %s28, 1
        %s161 = smul.addr %s160, 8
        %s162 = scalar_lea.vmem [#allocation2], %s161
        %p163 = pneg %p41
        %p164 = pneg %p38
        %p165 = pneg %p62
        %p166 = pneg %p59
        %p167 = pneg %p88
        %p168 = pneg %p85
        %s169 = sand.u32 %s75, 1
        %s170 = scalar_lea.sflag [#allocation4], %s169
        %s171 = sand.u32 %s75, 1
        %s172 = smul.addr %s171, 8
        %s173 = scalar_lea.vmem [#allocation7], %s172
        %v174 = vld [vmem:[%s149] sm:$0xff]
        %v175 = vld [vmem:[#allocation5] sm:$0xff]
        %v176 = vld [vmem:[#allocation5 + $0x8] sm:$0xff]
        %v177 = vld [vmem:[#allocation5 + $0x10] sm:$0xff]
        %v178 = vld [vmem:[#allocation5 + $0x18] sm:$0xff]
        %vm179 = vcmask 261120
        %v181 = vsel %vm179, %v174, 0
        %183 = vmatprep.subr.mxu0 0.0
        %184 = vmatpush1.msra.mxu0 0.0
        %185 = vmatprep.subr.mxu0 0.0
        %186 = vmatpush1.msra.mxu0 0.0
        %187 = vmatprep.subr.mxu0 0.0
        %188 = vmatpush1.msra.mxu0 0.0
        %189 = vmatprep.subr.mxu0 0.0
        %190 = vmatpush1.msra.mxu0 0.0
        %191 = vmatprep.subr.mxu0 0.0
        %192 = vmatpush1.msra.mxu0 0.0
        %193 = vmatprep.subr.mxu0 0.0
        %194 = vmatpush1.msra.mxu0 0.0
        %195 = vmatprep.subr.mxu0 0.0
        %196 = vmatpush1.msra.mxu0 0.0
        %197 = vmatprep.subr.mxu0 0.0
        %198 = vmatpush1.msra.mxu0 0.0
        %199 = vmatprep.subr.mxu0 0.0
        %200 = vmatpush1.msra.mxu0 0.0
        %201 = vmatprep.subr.mxu0 0.0
        %202 = vmatpush1.msra.mxu0 0.0
        %203 = vmatprep.subr.mxu0 0.0
        %204 = vmatpush1.msra.mxu0 0.0
        %205 = vmatprep.subr.mxu0 0.0
        %206 = vmatpush1.msra.mxu0 0.0
        %207 = vmatprep.subr.mxu0 0.0
        %208 = vmatpush1.msra.mxu0 %v178
        %209 = vmatprep.subr.mxu0 0.0
        %210 = vmatpush1.msra.mxu0 %v177
        %211 = vmatprep.subr.mxu0 0.0
        %212 = vmatpush1.msra.mxu0 %v176
        %213 = vmatprep.subr.mxu0 0.0
        %214 = vmatpush1.msra.mxu0 %v175
        %215 = vmatprep.subr.mxu0 0.0
        %216 = vmatpush2.msra.mxu0 0.0
        %217 = vmatprep.subr.mxu0 0.0
        %218 = vmatpush2.msra.mxu0 0.0
        %219 = vmatprep.subr.mxu0 0.0
        %220 = vmatpush2.msra.mxu0 0.0
        %221 = vmatprep.subr.mxu0 0.0
        %222 = vmatpush2.msra.mxu0 0.0
        %223 = vmatprep.subr.mxu0 0.0
        %224 = vmatpush2.msra.mxu0 0.0
        %225 = vmatprep.subr.mxu0 0.0
        %226 = vmatpush2.msra.mxu0 0.0
        %227 = vmatprep.subr.mxu0 0.0
        %228 = vmatpush2.msra.mxu0 0.0
        %229 = vmatprep.subr.mxu0 0.0
        %230 = vmatpush2.msra.mxu0 0.0
        %231 = vmatprep.subr.mxu0 0.0
        %232 = vmatpush2.msra.mxu0 0.0
        %233 = vmatprep.subr.mxu0 0.0
        %234 = vmatpush2.msra.mxu0 0.0
        %235 = vmatprep.subr.mxu0 0.0
        %236 = vmatpush2.msra.mxu0 0.0
        %237 = vmatprep.subr.mxu0 0.0
        %238 = vmatpush2.msra.mxu0 0.0
        %239 = vmatprep.subr.mxu0 0.0
        %240 = vmatpush2.msra.mxu0 0.0
        %241 = vmatprep.subr.mxu0 0.0
        %242 = vmatpush2.msra.mxu0 0.0
        %243 = vmatprep.subr.mxu0 0.0
        %244 = vmatpush2.msra.mxu0 0.0
        %245 = vmatprep.subr.mxu0 0.0
        %246 = vmatpush2.msra.mxu0 0.0
        %247 = vmatprep.mubr.f32.mxu0 0.0
        %248 = vmatmul.mubr.f32.gmra.mxu0 %v181
        %v249 = vpop.f32.mrf.mxu0
        %v250 = vadd.f32 0.0, %v249
        %v251 = vpop.f32.mrf.mxu0
        %252 = vdwg.mxu0
        %254 = vrot.lane.b32.xlu0 %v250, 112
        %v255 = vpop.permute.xlu0 %254
        %vm256 = vcmask 130048
        %v257 = vsel %vm256, %v250, 0
        %v259 = vsel %vm256, %v255, 0
        %261 = vmatprep.subr.mxu0 0.0
        %262 = vmatpush1.xpose.msra.mxu0 0.0
        %263 = vmatprep.subr.mxu0 0.0
        %264 = vmatpush1.xpose.msra.mxu0 0.0
        %265 = vmatprep.subr.mxu0 0.0
        %266 = vmatpush1.xpose.msra.mxu0 0.0
        %267 = vmatprep.subr.mxu0 0.0
        %268 = vmatpush1.xpose.msra.mxu0 0.0
        %269 = vmatprep.subr.mxu0 0.0
        %270 = vmatpush1.xpose.msra.mxu0 0.0
        %271 = vmatprep.subr.mxu0 0.0
        %272 = vmatpush1.xpose.msra.mxu0 0.0
        %273 = vmatprep.subr.mxu0 0.0
        %274 = vmatpush1.xpose.msra.mxu0 0.0
        %275 = vmatprep.subr.mxu0 0.0
        %276 = vmatpush1.xpose.msra.mxu0 0.0
        %277 = vmatprep.subr.mxu0 0.0
        %278 = vmatpush1.xpose.msra.mxu0 0.0
        %279 = vmatprep.subr.mxu0 0.0
        %280 = vmatpush1.xpose.msra.mxu0 0.0
        %281 = vmatprep.subr.mxu0 0.0
        %282 = vmatpush1.xpose.msra.mxu0 0.0
        %283 = vmatprep.subr.mxu0 0.0
        %284 = vmatpush1.xpose.msra.mxu0 0.0
        %285 = vmatprep.subr.mxu0 0.0
        %286 = vmatpush1.xpose.msra.mxu0 0.0
        %287 = vmatprep.subr.mxu0 0.0
        %288 = vmatpush1.xpose.msra.mxu0 0.0
        %289 = vmatprep.subr.mxu0 0.0
        %290 = vmatpush1.xpose.msra.mxu0 0.0
        %291 = vmatprep.subr.mxu0 0.0
        %292 = vmatpush1.xpose.msra.mxu0 %v259
        %293 = vmatprep.subr.mxu0 0.0
        %294 = vmatpush2.xpose.msra.mxu0 0.0
        %295 = vmatprep.subr.mxu0 0.0
        %296 = vmatpush2.xpose.msra.mxu0 0.0
        %297 = vmatprep.subr.mxu0 0.0
        %298 = vmatpush2.xpose.msra.mxu0 0.0
        %299 = vmatprep.subr.mxu0 0.0
        %300 = vmatpush2.xpose.msra.mxu0 0.0
        %301 = vmatprep.subr.mxu0 0.0
        %302 = vmatpush2.xpose.msra.mxu0 0.0
        %303 = vmatprep.subr.mxu0 0.0
        %304 = vmatpush2.xpose.msra.mxu0 0.0
        %305 = vmatprep.subr.mxu0 0.0
        %306 = vmatpush2.xpose.msra.mxu0 0.0
        %307 = vmatprep.subr.mxu0 0.0
        %308 = vmatpush2.xpose.msra.mxu0 0.0
        %309 = vmatprep.subr.mxu0 0.0
        %310 = vmatpush2.xpose.msra.mxu0 0.0
        %311 = vmatprep.subr.mxu0 0.0
        %312 = vmatpush2.xpose.msra.mxu0 0.0
        %313 = vmatprep.subr.mxu0 0.0
        %314 = vmatpush2.xpose.msra.mxu0 0.0
        %315 = vmatprep.subr.mxu0 0.0
        %316 = vmatpush2.xpose.msra.mxu0 0.0
        %317 = vmatprep.subr.mxu0 0.0
        %318 = vmatpush2.xpose.msra.mxu0 0.0
        %319 = vmatprep.subr.mxu0 0.0
        %320 = vmatpush2.xpose.msra.mxu0 0.0
        %321 = vmatprep.subr.mxu0 0.0
        %322 = vmatpush2.xpose.msra.mxu0 0.0
        %323 = vmatprep.subr.mxu0 0.0
        %324 = vmatpush2.xpose.msra.mxu0 0.0
        %325 = vmatprep.mubr.f32.mxu0 0.0
        %326 = vmatmul.mubr.f32.gmra.mxu0 %v257
        %v327 = vpop.f32.mrf.mxu0
        %v328 = vadd.f32 0.0, %v327
        %v329 = vpop.f32.mrf.mxu0
        %330 = vdwg.mxu0
        %v331 = vmul.f32 %v328, 0.17677669
        %v332 = vlaneseq
        %v333 = vshrl.u32 %v332, 7
        %v334 = vlaneseq
        %v335 = vand.u32 %v334, 127
        %vm336 = vcmp.le.s32.totalorder %v335, %v333
        %v337 = vsel %vm336, %v331, -1e+30
        %vm338 = vcmask 64512
        %v339 = vsel %vm338, %v337, -inf
        %340 = vmax.xlane.f32.xlu0 %v339
        %v341 = vpop.xlane.xlu0 %340
        %v342 = vsub.f32 %v337, %v341
        %v343 = vmul.f32 %v342, 1.442695
        %v344 = vpow.pop %v343
        %v345 = vsel %vm338, %v344, 0.0
        %346 = vadd.xlane.f32.xlu0 %v345
        %v347 = vpop.xlane.xlu0 %346
        %v348 = vrcp.pop %v347
        %v349 = vmul.f32 %v344, %v348
        %350 = vrot.lane.b32.xlu0 %v250, 96
        %v351 = vpop.permute.xlu0 %350
        %v354 = vsel %vm338, %v349, 0
        %356 = vmatprep.subr.mxu0 0.0
        %357 = vmatpush1.msra.mxu0 0.0
        %358 = vmatprep.subr.mxu0 0.0
        %359 = vmatpush1.msra.mxu0 0.0
        %360 = vmatprep.subr.mxu0 0.0
        %361 = vmatpush1.msra.mxu0 0.0
        %362 = vmatprep.subr.mxu0 0.0
        %363 = vmatpush1.msra.mxu0 0.0
        %364 = vmatprep.subr.mxu0 0.0
        %365 = vmatpush1.msra.mxu0 0.0
        %366 = vmatprep.subr.mxu0 0.0
        %367 = vmatpush1.msra.mxu0 0.0
        %368 = vmatprep.subr.mxu0 0.0
        %369 = vmatpush1.msra.mxu0 0.0
        %370 = vmatprep.subr.mxu0 0.0
        %371 = vmatpush1.msra.mxu0 0.0
        %372 = vmatprep.subr.mxu0 0.0
        %373 = vmatpush1.msra.mxu0 0.0
        %374 = vmatprep.subr.mxu0 0.0
        %375 = vmatpush1.msra.mxu0 0.0
        %376 = vmatprep.subr.mxu0 0.0
        %377 = vmatpush1.msra.mxu0 0.0
        %378 = vmatprep.subr.mxu0 0.0
        %379 = vmatpush1.msra.mxu0 0.0
        %380 = vmatprep.subr.mxu0 0.0
        %381 = vmatpush1.msra.mxu0 0.0
        %382 = vmatprep.subr.mxu0 0.0
        %383 = vmatpush1.msra.mxu0 0.0
        %384 = vmatprep.subr.mxu0 0.0
        %385 = vmatpush1.msra.mxu0 0.0
        %386 = vmatprep.subr.mxu0 0.0
        %387 = vmatpush1.msra.mxu0 %v351
        %388 = vmatprep.subr.mxu0 0.0
        %389 = vmatpush2.msra.mxu0 0.0
        %390 = vmatprep.subr.mxu0 0.0
        %391 = vmatpush2.msra.mxu0 0.0
        %392 = vmatprep.subr.mxu0 0.0
        %393 = vmatpush2.msra.mxu0 0.0
        %394 = vmatprep.subr.mxu0 0.0
        %395 = vmatpush2.msra.mxu0 0.0
        %396 = vmatprep.subr.mxu0 0.0
        %397 = vmatpush2.msra.mxu0 0.0
        %398 = vmatprep.subr.mxu0 0.0
        %399 = vmatpush2.msra.mxu0 0.0
        %400 = vmatprep.subr.mxu0 0.0
        %401 = vmatpush2.msra.mxu0 0.0
        %402 = vmatprep.subr.mxu0 0.0
        %403 = vmatpush2.msra.mxu0 0.0
        %404 = vmatprep.subr.mxu0 0.0
        %405 = vmatpush2.msra.mxu0 0.0
        %406 = vmatprep.subr.mxu0 0.0
        %407 = vmatpush2.msra.mxu0 0.0
        %408 = vmatprep.subr.mxu0 0.0
        %409 = vmatpush2.msra.mxu0 0.0
        %410 = vmatprep.subr.mxu0 0.0
        %411 = vmatpush2.msra.mxu0 0.0
        %412 = vmatprep.subr.mxu0 0.0
        %413 = vmatpush2.msra.mxu0 0.0
        %414 = vmatprep.subr.mxu0 0.0
        %415 = vmatpush2.msra.mxu0 0.0
        %416 = vmatprep.subr.mxu0 0.0
        %417 = vmatpush2.msra.mxu0 0.0
        %418 = vmatprep.subr.mxu0 0.0
        %419 = vmatpush2.msra.mxu0 0.0
        %420 = vmatprep.mubr.f32.mxu0 0.0
        %421 = vmatmul.mubr.f32.gmra.mxu0 %v354
        %v422 = vpop.f32.mrf.mxu0
        %v423 = vadd.f32 0.0, %v422
        %v424 = vpop.f32.mrf.mxu0
        %425 = vdwg.mxu0
        %426 = vst.msk [vmem:[%s173] sm:$0xff] %vm256, %v423
        %s427 = sand.u32 %s75, 1
        %s428 = scalar_lea.sflag [#allocation4], %s427
        %s429 = sand.u32 %s75, 1
        %s430 = smul.addr %s429, 8
        %s431 = scalar_lea.vmem [#allocation7], %s430
        // Predicated region
        $region37: #{tpu_custom_call.1} parent=27 // pred_check
          %p432 = pneg %p85
        $region38: #{tpu_custom_call.1} parent=27 // pred_check_branch
          %434 = sbr.rel (%p432) target = $region40
        $region39: #{tpu_custom_call.1} parent=27 // pred_region
          %s436 = ssub.s32 128, 128
          %437 = vsyncadd %s428, %s436
          %s438 = smul.addr %s20, 128
          %s439 = scalar_lea.hbm %s2, %s438
          %s441 = sshll.u32 %s431, 4
          %s442 = int_to_ptr.vmem [resolvable:$true] %s441
          %444 = dma.vmem_to_hbm [thread:$0]  %s442, 128, %s439, %s428
        $region40: #{tpu_custom_call.1} parent=27 // pred_fallthru
          _
      $region28: #{tpu_custom_call.1} parent=5 // pred_fallthru
        _
      %p445 = scmp.le.s32.totalorder 2, %s15
      // Predicated region
      $region41: #{tpu_custom_call.1} parent=5 // pred_check
        %p446 = pneg %p445
      $region42: #{tpu_custom_call.1} parent=5 // pred_check_branch
        %448 = sbr.rel (%p446) target = $region44
      $region43: #{tpu_custom_call.1} parent=5 // pred_region
        %s449 = ssub.s32 %s15, 2
        // Predicated region
        $region45: #{tpu_custom_call.1} parent=43 // pred_check
          %p450 = pneg %p91
        $region46: #{tpu_custom_call.1} parent=43 // pred_check_branch
          %452 = sbr.rel (%p450) target = $region48
        $region47: #{tpu_custom_call.1} parent=43 // pred_region
          %s453 = sand.u32 %s76, 1
          %s454 = scalar_lea.sflag [#allocation4], %s453
          %s455 = sand.u32 %s76, 1
          %s456 = smul.addr %s455, 8
          %s457 = scalar_lea.vmem [#allocation7], %s456
          %458 = dma.done %s454, 128
        $region48: #{tpu_custom_call.1} parent=43 // pred_fallthru
          _
      $region44: #{tpu_custom_call.1} parent=5 // pred_fallthru
        _
    $region6: #{tpu_custom_call.1} parent=1 // loop_footer
      %s19 = sadd.s32 1, %s15
    $region7: #{tpu_custom_call.1} parent=1 // loop_footer_branch
      %14 = sbr.rel target = $region3
    $region8: #{tpu_custom_call.1} parent=1 // loop_exit
      _
    %459 = vsyncpa [#allocation3], 1
    %s460 = scalar_lea.sflag [#allocation3], 1
    %461 = vsyncpa %s460, 1
    %462 = vsyncpa [#allocation6], 1
    %463 = vsyncpa [#allocation4], 1
    %s464 = scalar_lea.sflag [#allocation4], 1
    %465 = vsyncpa %s464, 1

</llo_original>
